<compile_context>
chip_gen: v7x
topology: tpu7x:2x2x1
jax: 0.10.0
libtpu: 0.0.40
codegen_flags: <defaults>
</compile_context>

<pallas_src>
import numpy as np
import jax
import jax.numpy as jnp
from jax.experimental import pallas as pl
from jax.experimental.pallas import tpu as pltpu


_BM_CAP = 2048          # multiple of 128; ~12-16 MiB peak VMEM at these dims (fits 32 MiB scoped on all gens)
_SINGLE_STEP_MAX = 1024  # below this, one grid step (block == full batch; no padding / ragged block)


def _make_coupling_kernel(t_dim, tpad, bm, b_total, ragged):
    """3-layer MLP -> fused (s|t) head (pre-scattered, 128-lane padded) -> affine update."""

    def kernel(t_ref, cond_ref,
               w1t_ref, w1c_ref, b1_ref,
               w2_ref, b2_ref,
               w3f_ref, b3f_ref,
               y_ref, log_det_ref):
        T = t_ref[...].astype(jnp.float32)        # [BM, t_dim]
        c = cond_ref[...].astype(jnp.float32)     # [BM, cond_dim]

        if ragged:
            # Partial last block: zero out-of-range rows so exp/tanh stay finite.
            # (Pallas already discards their writes; this is NaN hygiene only.)
            row = (jax.lax.broadcasted_iota(jnp.int32, (bm, 1), 0)
                   + pl.program_id(0) * bm)
            valid = row < b_total
            T = jnp.where(valid, T, 0.0)
            c = jnp.where(valid, c, 0.0)

        # Layer 1 as a split GEMM (== concat([T_unmasked, cond]) @ W1; masked rows of w1t are 0).
        z1 = (jnp.dot(T, w1t_ref[...], preferred_element_type=jnp.float32)
              + jnp.dot(c, w1c_ref[...], preferred_element_type=jnp.float32)
              + b1_ref[...])
        h1 = jnp.maximum(z1, 0.0)                                       # [BM, H]
        h2 = jnp.maximum(
            jnp.dot(h1, w2_ref[...], preferred_element_type=jnp.float32) + b2_ref[...],
            0.0)

        # Fused s/t head: one GEMM into [BM, 2*tpad]; each head is padded to a 128-lane
        # boundary so the split needs no lane rotate.  Columns are pre-scattered to full
        # t_dim width (zeros at unmasked positions and in the padding lanes).
        p = jnp.dot(h2, w3f_ref[...], preferred_element_type=jnp.float32) + b3f_ref[...]
        s_full = jnp.tanh(p[:, :t_dim])                                 # [BM, t_dim]
        t_full = p[:, tpad:tpad + t_dim]                                # starts on a vreg boundary

        # Full-row affine update: unmasked dims see exp(tanh(0)) = 1 and shift 0 -> pass-through.
        y_ref[...] = (T * jnp.exp(s_full) + t_full).astype(y_ref.dtype)
        # Lane-dense log-det: one (1, BM) row with batch on the lane axis.
        log_det_ref[...] = jnp.sum(s_full, axis=1)[None, :]

    return kernel


def _choose_batch_tile(B):
    """Minimize grid steps: 1 step for small B, ~2 'parallel' steps (one per v7x TC) otherwise."""
    if B <= _SINGLE_STEP_MAX:
        return B, 1                       # block == full batch; no padding anywhere
    bm = min(_BM_CAP, ((pl.cdiv(B, 2) + 127) // 128) * 128)
    return bm, pl.cdiv(B, bm)


def conditional_affine_coupling_forward(T, cond, params, mask, hidden_dim):
    """Forward of ConditionalAffineCoupling.  Returns (y, log_det)."""
    mask_np = np.asarray(mask).astype(bool)
    masked_idx = np.nonzero(mask_np)[0]
    unmasked_idx = np.nonzero(~mask_np)[0]
    M = int(masked_idx.size)

    B, t_dim = T.shape
    cond_dim = cond.shape[1]
    nu = t_dim - M
    H = hidden_dim
    f32 = jnp.float32
    TPAD = ((t_dim + 127) // 128) * 128   # per-head width, padded to a 128-lane boundary

    w1, b1, w2, b2, w3, b3 = params

    # ---- parameter prep (tiny; static mask folded into zero-scattered weights).
    # In real training this would be cached alongside the parameters.
    w1t = jnp.zeros((t_dim, H), f32).at[unmasked_idx, :].set(w1[:nu].astype(f32))
    w1c = w1[nu:].astype(f32)                                    # [cond_dim, H]
    b1r = b1.reshape(1, H).astype(f32)
    w2f = w2.astype(f32)
    b2r = b2.reshape(1, H).astype(f32)
    b3r = b3.reshape(1, -1).astype(f32)
    # Fused + scattered s/t head: [H, 2*TPAD], s head in lanes [0, TPAD), t head in [TPAD, 2*TPAD).
    w3f = jnp.zeros((H, 2 * TPAD), f32)
    w3f = w3f.at[:, masked_idx].set(w3[:, :M].astype(f32))
    w3f = w3f.at[:, TPAD + masked_idx].set(w3[:, M:].astype(f32))
    b3f = jnp.zeros((1, 2 * TPAD), f32)
    b3f = b3f.at[:, masked_idx].set(b3r[:, :M])
    b3f = b3f.at[:, TPAD + masked_idx].set(b3r[:, M:])

    # ---- batch tiling (no wrapper pad: ragged last block is masked in-kernel / by Pallas) ----
    BM, n_steps = _choose_batch_tile(B)
    ragged = (B % BM) != 0
    kernel = _make_coupling_kernel(t_dim, TPAD, BM, B, ragged)

    y, log_det_row = pl.pallas_call(
        kernel,
        out_shape=(
            jax.ShapeDtypeStruct((B, t_dim), T.dtype),
            jax.ShapeDtypeStruct((1, B), f32),
        ),
        grid_spec=pltpu.PrefetchScalarGridSpec(
            num_scalar_prefetch=0,
            grid=(n_steps,),
            in_specs=[
                pl.BlockSpec((BM, t_dim), lambda i: (i, 0)),        # T tile
                pl.BlockSpec((BM, cond_dim), lambda i: (i, 0)),     # cond tile
                # Grid-invariant weights/biases (constant index_map -> fetched once).
                # TODO(synk): pipeline_mode=pl.Buffered(1) on these if H / t_dim grow
                # (halves weight VMEM footprint; negligible at H=32).
                pl.BlockSpec((t_dim, H), lambda i: (0, 0)),          # w1t (row-scattered)
                pl.BlockSpec((cond_dim, H), lambda i: (0, 0)),       # w1c
                pl.BlockSpec((1, H), lambda i: (0, 0)),              # b1
                pl.BlockSpec((H, H), lambda i: (0, 0)),              # w2
                pl.BlockSpec((1, H), lambda i: (0, 0)),              # b2
                pl.BlockSpec((H, 2 * TPAD), lambda i: (0, 0)),       # fused s|t head weights
                pl.BlockSpec((1, 2 * TPAD), lambda i: (0, 0)),       # fused s|t head bias
            ],
            out_specs=[
                pl.BlockSpec((BM, t_dim), lambda i: (i, 0)),         # full y row
                pl.BlockSpec((1, BM), lambda i: (0, i)),             # lane-dense log_det
            ],
        ),
        compiler_params=pltpu.CompilerParams(
            dimension_semantics=("parallel",),
            vmem_limit_bytes=32 * 1024 * 1024,   # explicit; re-derive if H/t_dim/BM grow (v7x: 64 MiB physical)
        ),
    )(T, cond, w1t, w1c, b1r, w2f, b2r, w3f, b3f)

    return y, log_det_row[0]


def _reference_forward(T, cond, params, mask):
    """Pure-JAX reference matching the PyTorch module semantics."""
    mask_np = np.asarray(mask).astype(bool)
    masked_idx = np.nonzero(mask_np)[0]
    unmasked_idx = np.nonzero(~mask_np)[0]
    M = int(masked_idx.size)
    w1, b1, w2, b2, w3, b3 = params
    h = jnp.concatenate([T[:, unmasked_idx], cond], axis=1)
    h1 = jax.nn.relu(h @ w1 + b1)
    h2 = jax.nn.relu(h1 @ w2 + b2)
    p = h2 @ w3 + b3
    s = jnp.tanh(p[:, :M])
    t_shift = p[:, M:]
    y_masked = T[:, masked_idx] * jnp.exp(s) + t_shift
    y = T.at[:, masked_idx].set(y_masked)
    return y, jnp.sum(s, axis=1)


if __name__ == "__main__":
    t_dim, cond_dim, hidden_dim = 6, 4, 32
    mask = [1, 0, 1, 0, 1, 0]           # transforms masked dims, passes unmasked through
    M = int(sum(mask))
    nn_in = (t_dim - M) + cond_dim
    nn_out = 2 * M

    key = jax.random.PRNGKey(0)
    k1, k2, k3, k4, k5, k6 = jax.random.split(key, 6)
    w1 = 0.1 * jax.random.normal(k1, (nn_in, hidden_dim), dtype=jnp.float32)
    b1 = 0.1 * jax.random.normal(k2, (1, hidden_dim), dtype=jnp.float32)
    w2 = 0.1 * jax.random.normal(k3, (hidden_dim, hidden_dim), dtype=jnp.float32)
    b2 = 0.1 * jax.random.normal(k4, (1, hidden_dim), dtype=jnp.float32)
    w3 = 0.1 * jax.random.normal(k5, (hidden_dim, nn_out), dtype=jnp.float32)
    b3 = 0.1 * jax.random.normal(k6, (1, nn_out), dtype=jnp.float32)
    params = (w1, b1, w2, b2, w3, b3)

    # B=20 / B=512: single-step full-batch block (no padding).
    # B=2307: two "parallel" steps with a ragged, in-kernel-masked last block.
    for B in (20, 512, 2307):
        kb = jax.random.fold_in(key, B)
        kT, kc = jax.random.split(kb)
        T = jax.random.normal(kT, (B, t_dim), dtype=jnp.float32)
        cond = jax.random.normal(kc, (B, cond_dim), dtype=jnp.float32)

        y, log_det = conditional_affine_coupling_forward(T, cond, params, mask, hidden_dim)
        y, log_det = jax.block_until_ready((y, log_det))

        y_ref, log_det_ref = _reference_forward(T, cond, params, mask)
        np.testing.assert_allclose(np.asarray(y), np.asarray(y_ref), rtol=1e-5, atol=1e-5)
        np.testing.assert_allclose(np.asarray(log_det), np.asarray(log_det_ref),
                                   rtol=1e-5, atol=1e-5)

    print("KERNEL_OK")
</pallas_src>

<mosaic_0001>
module attributes {stable_mosaic.version = 11 : i64} {
  func.func @kernel(%arg0: i32, %arg1: memref<20x6xf32, #tpu.memory_space<vmem>>, %arg2: memref<20x4xf32, #tpu.memory_space<vmem>>, %arg3: memref<6x32xf32, #tpu.memory_space<vmem>>, %arg4: memref<4x32xf32, #tpu.memory_space<vmem>>, %arg5: memref<1x32xf32, #tpu.memory_space<vmem>>, %arg6: memref<32x32xf32, #tpu.memory_space<vmem>>, %arg7: memref<1x32xf32, #tpu.memory_space<vmem>>, %arg8: memref<32x256xf32, #tpu.memory_space<vmem>>, %arg9: memref<1x256xf32, #tpu.memory_space<vmem>>, %arg10: memref<20x6xf32, #tpu.memory_space<vmem>>, %arg11: memref<1x20xf32, #tpu.memory_space<vmem>>) attributes {dimension_semantics = [#tpu.dimension_semantics<parallel>], iteration_bounds = array<i64: 1>, scalar_prefetch = 0 : i64, scratch_operands = 0 : i64, tpu.core_type = #tpu.core_type<tc>, window_params = [{transform_indices = @transform_0, window_bounds = array<i64: 20, 6>}, {transform_indices = @transform_1, window_bounds = array<i64: 20, 4>}, {pipeline_mode = #tpu.pipeline_mode<synchronous>, transform_indices = @transform_2, window_bounds = array<i64: 6, 32>}, {pipeline_mode = #tpu.pipeline_mode<synchronous>, transform_indices = @transform_3, window_bounds = array<i64: 4, 32>}, {pipeline_mode = #tpu.pipeline_mode<synchronous>, transform_indices = @transform_4, window_bounds = array<i64: 1, 32>}, {pipeline_mode = #tpu.pipeline_mode<synchronous>, transform_indices = @transform_5, window_bounds = array<i64: 32, 32>}, {pipeline_mode = #tpu.pipeline_mode<synchronous>, transform_indices = @transform_6, window_bounds = array<i64: 1, 32>}, {pipeline_mode = #tpu.pipeline_mode<synchronous>, transform_indices = @transform_7, window_bounds = array<i64: 32, 256>}, {pipeline_mode = #tpu.pipeline_mode<synchronous>, transform_indices = @transform_8, window_bounds = array<i64: 1, 256>}, {transform_indices = @transform_9, window_bounds = array<i64: 20, 6>}, {transform_indices = @transform_10, window_bounds = array<i64: 1, 20>}]} {
    %c0 = arith.constant 0 : index
    %c0_0 = arith.constant 0 : index
    %0 = vector.load %arg1[%c0, %c0_0] : memref<20x6xf32, #tpu.memory_space<vmem>>, vector<20x6xf32>
    %c0_1 = arith.constant 0 : index
    %c0_2 = arith.constant 0 : index
    %1 = vector.load %arg2[%c0_1, %c0_2] : memref<20x4xf32, #tpu.memory_space<vmem>>, vector<20x4xf32>
    %c0_3 = arith.constant 0 : index
    %c0_4 = arith.constant 0 : index
    %2 = vector.load %arg3[%c0_3, %c0_4] : memref<6x32xf32, #tpu.memory_space<vmem>>, vector<6x32xf32>
    %cst = arith.constant dense<0.000000e+00> : vector<20x32xf32>
    %3 = tpu.matmul %0, %2, %cst {dimension_numbers = #tpu.dot_dimension_numbers<[1], [0], [0], [1], [0, 0, 1, 1], [], []>} : vector<20x6xf32>, vector<6x32xf32>, vector<20x32xf32> -> vector<20x32xf32>
    %c0_5 = arith.constant 0 : index
    %c0_6 = arith.constant 0 : index
    %4 = vector.load %arg4[%c0_5, %c0_6] : memref<4x32xf32, #tpu.memory_space<vmem>>, vector<4x32xf32>
    %cst_7 = arith.constant dense<0.000000e+00> : vector<20x32xf32>
    %5 = tpu.matmul %1, %4, %cst_7 {dimension_numbers = #tpu.dot_dimension_numbers<[1], [0], [0], [1], [0, 0, 1, 1], [], []>} : vector<20x4xf32>, vector<4x32xf32>, vector<20x32xf32> -> vector<20x32xf32>
    %6 = arith.addf %3, %5 : vector<20x32xf32>
    %c0_8 = arith.constant 0 : index
    %c0_9 = arith.constant 0 : index
    %7 = vector.load %arg5[%c0_8, %c0_9] : memref<1x32xf32, #tpu.memory_space<vmem>>, vector<1x32xf32>
    %8 = vector.broadcast %7 : vector<1x32xf32> to vector<20x32xf32>
    %9 = arith.addf %6, %8 : vector<20x32xf32>
    %cst_10 = arith.constant 0.000000e+00 : f32
    %10 = vector.broadcast %cst_10 : f32 to vector<20x32xf32>
    %11 = arith.maximumf %9, %10 : vector<20x32xf32>
    %c0_11 = arith.constant 0 : index
    %c0_12 = arith.constant 0 : index
    %12 = vector.load %arg6[%c0_11, %c0_12] : memref<32x32xf32, #tpu.memory_space<vmem>>, vector<32x32xf32>
    %cst_13 = arith.constant dense<0.000000e+00> : vector<20x32xf32>
    %13 = tpu.matmul %11, %12, %cst_13 {dimension_numbers = #tpu.dot_dimension_numbers<[1], [0], [0], [1], [0, 0, 1, 1], [], []>} : vector<20x32xf32>, vector<32x32xf32>, vector<20x32xf32> -> vector<20x32xf32>
    %c0_14 = arith.constant 0 : index
    %c0_15 = arith.constant 0 : index
    %14 = vector.load %arg7[%c0_14, %c0_15] : memref<1x32xf32, #tpu.memory_space<vmem>>, vector<1x32xf32>
    %15 = vector.broadcast %14 : vector<1x32xf32> to vector<20x32xf32>
    %16 = arith.addf %13, %15 : vector<20x32xf32>
    %cst_16 = arith.constant 0.000000e+00 : f32
    %17 = vector.broadcast %cst_16 : f32 to vector<20x32xf32>
    %18 = arith.maximumf %16, %17 : vector<20x32xf32>
    %c0_17 = arith.constant 0 : index
    %c0_18 = arith.constant 0 : index
    %19 = vector.load %arg8[%c0_17, %c0_18] : memref<32x256xf32, #tpu.memory_space<vmem>>, vector<32x256xf32>
    %cst_19 = arith.constant dense<0.000000e+00> : vector<20x256xf32>
    %20 = tpu.matmul %18, %19, %cst_19 {dimension_numbers = #tpu.dot_dimension_numbers<[1], [0], [0], [1], [0, 0, 1, 1], [], []>} : vector<20x32xf32>, vector<32x256xf32>, vector<20x256xf32> -> vector<20x256xf32>
    %c0_20 = arith.constant 0 : index
    %c0_21 = arith.constant 0 : index
    %21 = vector.load %arg9[%c0_20, %c0_21] : memref<1x256xf32, #tpu.memory_space<vmem>>, vector<1x256xf32>
    %22 = vector.broadcast %21 : vector<1x256xf32> to vector<20x256xf32>
    %23 = arith.addf %20, %22 : vector<20x256xf32>
    %24 = vector.extract_strided_slice %23 {offsets = [0, 0], sizes = [20, 6], strides = [1, 1]} : vector<20x256xf32> to vector<20x6xf32>
    %25 = math.tanh %24 : vector<20x6xf32>
    %26 = vector.extract_strided_slice %23 {offsets = [0, 128], sizes = [20, 6], strides = [1, 1]} : vector<20x256xf32> to vector<20x6xf32>
    %27 = math.exp %25 : vector<20x6xf32>
    %28 = arith.mulf %0, %27 : vector<20x6xf32>
    %29 = arith.addf %28, %26 : vector<20x6xf32>
    %c0_22 = arith.constant 0 : index
    %c0_23 = arith.constant 0 : index
    %30 = vector.load %arg10[%c0_22, %c0_23] : memref<20x6xf32, #tpu.memory_space<vmem>>, vector<20x6xf32>
    tpu.vector_store %arg10[%c0_22, %c0_23], %29 {strides = array<i32>} : memref<20x6xf32, #tpu.memory_space<vmem>>, vector<20x6xf32>,
    %cst_24 = arith.constant dense<0.000000e+00> : vector<20xf32>
    %31 = vector.multi_reduction <add>, %25, %cst_24 [1] : vector<20x6xf32> to vector<20xf32>
    %32 = vector.shape_cast %31 : vector<20xf32> to vector<1x20xf32>
    %c0_25 = arith.constant 0 : index
    %c0_26 = arith.constant 0 : index
    %33 = vector.load %arg11[%c0_25, %c0_26] : memref<1x20xf32, #tpu.memory_space<vmem>>, vector<1x20xf32>
    tpu.vector_store %arg11[%c0_25, %c0_26], %32 {strides = array<i32>} : memref<1x20xf32, #tpu.memory_space<vmem>>, vector<1x20xf32>,
    return
  }
  func.func @transform_0(%arg0: i32) -> (i32, i32) {
    %c0_i32 = arith.constant 0 : i32
    %c0_i32_0 = arith.constant 0 : i32
    return %arg0, %c0_i32 : i32, i32
  }
  func.func @transform_1(%arg0: i32) -> (i32, i32) {
    %c0_i32 = arith.constant 0 : i32
    %c0_i32_0 = arith.constant 0 : i32
    return %arg0, %c0_i32 : i32, i32
  }
  func.func @transform_2(%arg0: i32) -> (i32, i32) {
    %c0_i32 = arith.constant 0 : i32
    %c0_i32_0 = arith.constant 0 : i32
    %c0_i32_1 = arith.constant 0 : i32
    return %c0_i32, %c0_i32_0 : i32, i32
  }
  func.func @transform_3(%arg0: i32) -> (i32, i32) {
    %c0_i32 = arith.constant 0 : i32
    %c0_i32_0 = arith.constant 0 : i32
    %c0_i32_1 = arith.constant 0 : i32
    return %c0_i32, %c0_i32_0 : i32, i32
  }
  func.func @transform_4(%arg0: i32) -> (i32, i32) {
    %c0_i32 = arith.constant 0 : i32
    %c0_i32_0 = arith.constant 0 : i32
    %c0_i32_1 = arith.constant 0 : i32
    return %c0_i32, %c0_i32_0 : i32, i32
  }
  func.func @transform_5(%arg0: i32) -> (i32, i32) {
    %c0_i32 = arith.constant 0 : i32
    %c0_i32_0 = arith.constant 0 : i32
    %c0_i32_1 = arith.constant 0 : i32
    return %c0_i32, %c0_i32_0 : i32, i32
  }
  func.func @transform_6(%arg0: i32) -> (i32, i32) {
    %c0_i32 = arith.constant 0 : i32
    %c0_i32_0 = arith.constant 0 : i32
    %c0_i32_1 = arith.constant 0 : i32
    return %c0_i32, %c0_i32_0 : i32, i32
  }
  func.func @transform_7(%arg0: i32) -> (i32, i32) {
    %c0_i32 = arith.constant 0 : i32
    %c0_i32_0 = arith.constant 0 : i32
    %c0_i32_1 = arith.constant 0 : i32
    return %c0_i32, %c0_i32_0 : i32, i32
  }
  func.func @transform_8(%arg0: i32) -> (i32, i32) {
    %c0_i32 = arith.constant 0 : i32
    %c0_i32_0 = arith.constant 0 : i32
    %c0_i32_1 = arith.constant 0 : i32
    return %c0_i32, %c0_i32_0 : i32, i32
  }
  func.func @transform_9(%arg0: i32) -> (i32, i32) {
    %c0_i32 = arith.constant 0 : i32
    %c0_i32_0 = arith.constant 0 : i32
    return %arg0, %c0_i32 : i32, i32
  }
  func.func @transform_10(%arg0: i32) -> (i32, i32) {
    %c0_i32 = arith.constant 0 : i32
    %c0_i32_0 = arith.constant 0 : i32
    return %c0_i32, %arg0 : i32, i32
  }
}

</mosaic_0001>

<llo_original>
// kernel: tpu_custom_call.1
$region0: #{tpu_custom_call.1}
  #allocation0 [shape = 'u32[]', space=smem, size = 0x4, offset = 0x4, fixed_abs, tag = 'smem constant byte address 0x4 - core index']
  #allocation1 [shape = 'u32[144,128]{1,0:T(1,128)}', space=vmem, size = 0x12000, scoped, tag = 'internal scratch']
  %s0 = inlined_call_operand.vmem [shape: f32[20,6], index: 0, kind: input, shape index: {}]
  %s1 = inlined_call_operand.vmem [shape: f32[20,4], index: 1, kind: input, shape index: {}]
  %s2 = inlined_call_operand.vmem [shape: f32[6,32], index: 2, kind: input, shape index: {}]
  %s3 = inlined_call_operand.vmem [shape: f32[4,32], index: 3, kind: input, shape index: {}]
  %s4 = inlined_call_operand.vmem [shape: f32[1,32], index: 4, kind: input, shape index: {}]
  %s5 = inlined_call_operand.hbm [shape: f32[32,32], index: 5, kind: input, shape index: {}]
  %s6 = inlined_call_operand.vmem [shape: f32[1,32], index: 6, kind: input, shape index: {}]
  %s7 = inlined_call_operand.vmem [shape: f32[32,256], index: 7, kind: input, shape index: {}]
  %s8 = inlined_call_operand.vmem [shape: f32[1,256], index: 8, kind: input, shape index: {}]
  %s9 = inlined_call_operand.vmem [shape: f32[20,6], index: 9, kind: output, shape index: {0}]
  %s10 = inlined_call_operand.hbm [shape: f32[1,20], index: 10, kind: output, shape index: {1}]
  %11 = xla_tuple %s9, %s10
  %s12 = sld [smem:[#allocation0]]
  $region58: #{tpu_custom_call.1} parent=0
    _
  %s14 = ssub.s32 1, %s12
  %s15 = scalar_select 0, %s14, %s12
  $region1: #{tpu_custom_call.1} parent=0
    #allocation2 [shape = 'u8[16384]{0}', space=vmem, size = 0x4000, scoped, tag = 'input window, operand 5, single buffered']
    #allocation3 [shape = 's32[1]{0}', space=sflag, size = 0x4, scoped, tag = 'scoped memory for tpu_custom_call.1']
    #allocation4 [shape = 's32[1]{0}', space=sflag, size = 0x4, scoped, tag = 'scoped memory for tpu_custom_call.1']
    #allocation5 [shape = 'u8[512]{0}', space=vmem, size = 0x400, scoped, tag = 'output window, operand 1, single buffered']
    %16 = vsyncpa [#allocation3], 0
    %17 = vsyncpa [#allocation4], 0
    // Predicated region
    $region2: #{tpu_custom_call.1} parent=1 // pred_check
      _
    $region3: #{tpu_custom_call.1} parent=1 // pred_check_branch
      %19 = sbr.rel (0) target = $region5
    $region4: #{tpu_custom_call.1} parent=1 // pred_region
      _
    $region5: #{tpu_custom_call.1} parent=1 // pred_fallthru
      _
    // Predicated region
    $region6: #{tpu_custom_call.1} parent=1 // pred_check
      _
    $region7: #{tpu_custom_call.1} parent=1 // pred_check_branch
      %21 = sbr.rel (0) target = $region9
    $region8: #{tpu_custom_call.1} parent=1 // pred_region
      _
    $region9: #{tpu_custom_call.1} parent=1 // pred_fallthru
      _
    // Predicated region
    $region10: #{tpu_custom_call.1} parent=1 // pred_check
      _
    $region11: #{tpu_custom_call.1} parent=1 // pred_check_branch
      %23 = sbr.rel (0) target = $region13
    $region12: #{tpu_custom_call.1} parent=1 // pred_region
      _
    $region13: #{tpu_custom_call.1} parent=1 // pred_fallthru
      _
    // Predicated region
    $region14: #{tpu_custom_call.1} parent=1 // pred_check
      _
    $region15: #{tpu_custom_call.1} parent=1 // pred_check_branch
      %25 = sbr.rel (0) target = $region17
    $region16: #{tpu_custom_call.1} parent=1 // pred_region
      _
    $region17: #{tpu_custom_call.1} parent=1 // pred_fallthru
      _
    // Predicated region
    $region18: #{tpu_custom_call.1} parent=1 // pred_check
      _
    $region19: #{tpu_custom_call.1} parent=1 // pred_check_branch
      %27 = sbr.rel (0) target = $region21
    $region20: #{tpu_custom_call.1} parent=1 // pred_region
      _
    $region21: #{tpu_custom_call.1} parent=1 // pred_fallthru
      _
    // Predicated region
    $region22: #{tpu_custom_call.1} parent=1 // pred_check
      _
    $region23: #{tpu_custom_call.1} parent=1 // pred_check_branch
      %29 = sbr.rel (0) target = $region25
    $region24: #{tpu_custom_call.1} parent=1 // pred_region
      %s31 = ssub.s32 512, 512
      %32 = vsyncadd [#allocation3], %s31
      %s33 = sshll.u32 [#allocation2], 4
      %s34 = int_to_ptr.vmem [resolvable:$true] %s33
      %39 = dma.hbm_to_vmem [thread:$0]  %s5, 512, %s34, [#allocation3], 128, 128, 8
    $region25: #{tpu_custom_call.1} parent=1 // pred_fallthru
      _
    // Predicated region
    $region26: #{tpu_custom_call.1} parent=1 // pred_check
      _
    $region27: #{tpu_custom_call.1} parent=1 // pred_check_branch
      %41 = sbr.rel (0) target = $region29
    $region28: #{tpu_custom_call.1} parent=1 // pred_region
      _
    $region29: #{tpu_custom_call.1} parent=1 // pred_fallthru
      _
    // Predicated region
    $region30: #{tpu_custom_call.1} parent=1 // pred_check
      _
    $region31: #{tpu_custom_call.1} parent=1 // pred_check_branch
      %43 = sbr.rel (0) target = $region33
    $region32: #{tpu_custom_call.1} parent=1 // pred_region
      _
    $region33: #{tpu_custom_call.1} parent=1 // pred_fallthru
      _
    // Predicated region
    $region34: #{tpu_custom_call.1} parent=1 // pred_check
      _
    $region35: #{tpu_custom_call.1} parent=1 // pred_check_branch
      %45 = sbr.rel (0) target = $region37
    $region36: #{tpu_custom_call.1} parent=1 // pred_region
      _
    $region37: #{tpu_custom_call.1} parent=1 // pred_fallthru
      _
    // Predicated region
    $region38: #{tpu_custom_call.1} parent=1 // pred_check
      _
    $region39: #{tpu_custom_call.1} parent=1 // pred_check_branch
      %47 = sbr.rel (0) target = $region41
    $region40: #{tpu_custom_call.1} parent=1 // pred_region
      %48 = dma.done [#allocation3], 512
    $region41: #{tpu_custom_call.1} parent=1 // pred_fallthru
      _
    %v49 = vld [vmem:[%s0] sm:$0xff]
    %v50 = vld [vmem:[%s0 + $0x8] sm:$0xff]
    %v51 = vld [vmem:[%s0 + $0x10] sm:$0xf]
    %v52 = vld [vmem:[%s1] sm:$0xff]
    %v53 = vld [vmem:[%s1 + $0x8] sm:$0xff]
    %v54 = vld [vmem:[%s1 + $0x10] sm:$0xf]
    %v55 = vld [vmem:[%s2] sm:$0x3f]
    %v56 = vld [vmem:[%s3] sm:$0xf]
    %vm57 = vcmask 31744
    %v59 = vsel %vm57, %v52, 0
    %v62 = vsel %vm57, %v53, 0
    %v65 = vsel %vm57, %v54, 0
    %vm67 = vcmask 1043456
    %v69 = vsel %vm67, %v56, 0
    %71 = vmatprep.subr.mxu0 0.0
    %72 = vmatpush1.msra.mxu0 %v69
    %73 = vmatprep.subr.mxu0 0.0
    %74 = vmatpush1.msra.mxu0 0.0
    %75 = vmatprep.subr.mxu0 0.0
    %76 = vmatpush1.msra.mxu0 0.0
    %77 = vmatprep.subr.mxu0 0.0
    %78 = vmatpush1.msra.mxu0 0.0
    %79 = vmatprep.subr.mxu0 0.0
    %80 = vmatpush1.msra.mxu0 0.0
    %81 = vmatprep.subr.mxu0 0.0
    %82 = vmatpush1.msra.mxu0 0.0
    %83 = vmatprep.subr.mxu0 0.0
    %84 = vmatpush1.msra.mxu0 0.0
    %85 = vmatprep.subr.mxu0 0.0
    %86 = vmatpush1.msra.mxu0 0.0
    %87 = vmatprep.subr.mxu0 0.0
    %88 = vmatpush1.msra.mxu0 0.0
    %89 = vmatprep.subr.mxu0 0.0
    %90 = vmatpush1.msra.mxu0 0.0
    %91 = vmatprep.subr.mxu0 0.0
    %92 = vmatpush1.msra.mxu0 0.0
    %93 = vmatprep.subr.mxu0 0.0
    %94 = vmatpush1.msra.mxu0 0.0
    %95 = vmatprep.subr.mxu0 0.0
    %96 = vmatpush1.msra.mxu0 0.0
    %97 = vmatprep.subr.mxu0 0.0
    %98 = vmatpush1.msra.mxu0 0.0
    %99 = vmatprep.subr.mxu0 0.0
    %100 = vmatpush1.msra.mxu0 0.0
    %101 = vmatprep.subr.mxu0 0.0
    %102 = vmatpush1.msra.mxu0 0.0
    %103 = vmatprep.subr.mxu0 0.0
    %104 = vmatpush1.msra.mxu0 0.0
    %105 = vmatprep.subr.mxu0 0.0
    %106 = vmatpush1.msra.mxu0 0.0
    %107 = vmatprep.subr.mxu0 0.0
    %108 = vmatpush1.msra.mxu0 0.0
    %109 = vmatprep.subr.mxu0 0.0
    %110 = vmatpush1.msra.mxu0 0.0
    %111 = vmatprep.subr.mxu0 0.0
    %112 = vmatpush1.msra.mxu0 0.0
    %113 = vmatprep.subr.mxu0 0.0
    %114 = vmatpush1.msra.mxu0 0.0
    %115 = vmatprep.subr.mxu0 0.0
    %116 = vmatpush1.msra.mxu0 0.0
    %117 = vmatprep.subr.mxu0 0.0
    %118 = vmatpush1.msra.mxu0 0.0
    %119 = vmatprep.subr.mxu0 0.0
    %120 = vmatpush1.msra.mxu0 0.0
    %121 = vmatprep.subr.mxu0 0.0
    %122 = vmatpush1.msra.mxu0 0.0
    %123 = vmatprep.subr.mxu0 0.0
    %124 = vmatpush1.msra.mxu0 0.0
    %125 = vmatprep.subr.mxu0 0.0
    %126 = vmatpush1.msra.mxu0 0.0
    %127 = vmatprep.subr.mxu0 0.0
    %128 = vmatpush1.msra.mxu0 0.0
    %129 = vmatprep.subr.mxu0 0.0
    %130 = vmatpush1.msra.mxu0 0.0
    %131 = vmatprep.subr.mxu0 0.0
    %132 = vmatpush1.msra.mxu0 0.0
    %133 = vmatprep.subr.mxu0 0.0
    %134 = vmatpush1.msra.mxu0 0.0
    %135 = vmatprep.mubr.f32.mxu0 0.0
    %136 = vmatmul.mubr.f32.gmra.mrb[0].mxu0 %v59
    %v137 = vpop.f32.mrb[0].mxu0
    %v138 = vadd.f32 0.0, %v137
    %v139 = vpop.f32.mrb[0].mxu0
    %140 = vmatprep.mubr.f32.mxu0 0.0
    %141 = vmatmul.mubr.f32.gmra.mrb[0].mxu0 %v62
    %v142 = vpop.f32.mrb[0].mxu0
    %v143 = vadd.f32 0.0, %v142
    %v144 = vpop.f32.mrb[0].mxu0
    %145 = vmatprep.mubr.f32.mxu0 0.0
    %146 = vmatmul.mubr.f32.gmra.mrb[0].mxu0 %v65
    %v147 = vpop.f32.mrb[0].mxu0
    %v148 = vadd.f32 0.0, %v147
    %v149 = vpop.f32.mrb[0].mxu0
    %150 = vdwg.mxu0
    %vm151 = vcmask 48128
    %v153 = vsel %vm151, %v49, 0
    %v156 = vsel %vm151, %v50, 0
    %v159 = vsel %vm151, %v51, 0
    %vm161 = vcmask 1045504
    %v163 = vsel %vm161, %v55, 0
    %165 = vmatprep.subr.mxu0 0.0
    %166 = vmatpush1.msra.mxu0 %v163
    %167 = vmatprep.subr.mxu0 0.0
    %168 = vmatpush1.msra.mxu0 0.0
    %169 = vmatprep.subr.mxu0 0.0
    %170 = vmatpush1.msra.mxu0 0.0
    %171 = vmatprep.subr.mxu0 0.0
    %172 = vmatpush1.msra.mxu0 0.0
    %173 = vmatprep.subr.mxu0 0.0
    %174 = vmatpush1.msra.mxu0 0.0
    %175 = vmatprep.subr.mxu0 0.0
    %176 = vmatpush1.msra.mxu0 0.0
    %177 = vmatprep.subr.mxu0 0.0
    %178 = vmatpush1.msra.mxu0 0.0
    %179 = vmatprep.subr.mxu0 0.0
    %180 = vmatpush1.msra.mxu0 0.0
    %181 = vmatprep.subr.mxu0 0.0
    %182 = vmatpush1.msra.mxu0 0.0
    %183 = vmatprep.subr.mxu0 0.0
    %184 = vmatpush1.msra.mxu0 0.0
    %185 = vmatprep.subr.mxu0 0.0
    %186 = vmatpush1.msra.mxu0 0.0
    %187 = vmatprep.subr.mxu0 0.0
    %188 = vmatpush1.msra.mxu0 0.0
    %189 = vmatprep.subr.mxu0 0.0
    %190 = vmatpush1.msra.mxu0 0.0
    %191 = vmatprep.subr.mxu0 0.0
    %192 = vmatpush1.msra.mxu0 0.0
    %193 = vmatprep.subr.mxu0 0.0
    %194 = vmatpush1.msra.mxu0 0.0
    %195 = vmatprep.subr.mxu0 0.0
    %196 = vmatpush1.msra.mxu0 0.0
    %197 = vmatprep.subr.mxu0 0.0
    %198 = vmatpush1.msra.mxu0 0.0
    %199 = vmatprep.subr.mxu0 0.0
    %200 = vmatpush1.msra.mxu0 0.0
    %201 = vmatprep.subr.mxu0 0.0
    %202 = vmatpush1.msra.mxu0 0.0
    %203 = vmatprep.subr.mxu0 0.0
    %204 = vmatpush1.msra.mxu0 0.0
    %205 = vmatprep.subr.mxu0 0.0
    %206 = vmatpush1.msra.mxu0 0.0
    %207 = vmatprep.subr.mxu0 0.0
    %208 = vmatpush1.msra.mxu0 0.0
    %209 = vmatprep.subr.mxu0 0.0
    %210 = vmatpush1.msra.mxu0 0.0
    %211 = vmatprep.subr.mxu0 0.0
    %212 = vmatpush1.msra.mxu0 0.0
    %213 = vmatprep.subr.mxu0 0.0
    %214 = vmatpush1.msra.mxu0 0.0
    %215 = vmatprep.subr.mxu0 0.0
    %216 = vmatpush1.msra.mxu0 0.0
    %217 = vmatprep.subr.mxu0 0.0
    %218 = vmatpush1.msra.mxu0 0.0
    %219 = vmatprep.subr.mxu0 0.0
    %220 = vmatpush1.msra.mxu0 0.0
    %221 = vmatprep.subr.mxu0 0.0
    %222 = vmatpush1.msra.mxu0 0.0
    %223 = vmatprep.subr.mxu0 0.0
    %224 = vmatpush1.msra.mxu0 0.0
    %225 = vmatprep.subr.mxu0 0.0
    %226 = vmatpush1.msra.mxu0 0.0
    %227 = vmatprep.subr.mxu0 0.0
    %228 = vmatpush1.msra.mxu0 0.0
    %229 = vmatprep.mubr.f32.mxu0 0.0
    %230 = vmatmul.mubr.f32.gmra.mrb[0].mxu0 %v153
    %v231 = vpop.f32.mrb[0].mxu0
    %v232 = vadd.f32 %v138, %v231
    %v233 = vpop.f32.mrb[0].mxu0
    %234 = vmatprep.mubr.f32.mxu0 0.0
    %235 = vmatmul.mubr.f32.gmra.mrb[0].mxu0 %v156
    %v236 = vpop.f32.mrb[0].mxu0
    %v237 = vadd.f32 %v143, %v236
    %v238 = vpop.f32.mrb[0].mxu0
    %239 = vmatprep.mubr.f32.mxu0 0.0
    %240 = vmatmul.mubr.f32.gmra.mrb[0].mxu0 %v159
    %v241 = vpop.f32.mrb[0].mxu0
    %v242 = vadd.f32 %v148, %v241
    %v243 = vpop.f32.mrb[0].mxu0
    %244 = vdwg.mxu0
    %v245 = vld [vmem:[%s4] sm:$0x1]
    %v247 = vlaneseq
    %v248 = vshrl.u32 %v247, 7
    %v249 = vsub.s32 0, %v248
    %v250 = vrot.slane %v245, %v249
    %v252 = vadd.f32 %v232, %v250
    %v253 = vadd.f32 %v237, %v250
    %v254 = vadd.f32 %v242, %v250
    %v255 = vmax.f32 %v252, 0.0
    %v256 = vmax.f32 %v253, 0.0
    %v257 = vmax.f32 %v254, 0.0
    %v258 = vld [vmem:[#allocation2] sm:$0xff]
    %v259 = vld [vmem:[#allocation2 + $0x8] sm:$0xff]
    %v260 = vld [vmem:[#allocation2 + $0x10] sm:$0xff]
    %v261 = vld [vmem:[#allocation2 + $0x18] sm:$0xff]
    %v262 = vld [vmem:[%s6] sm:$0x1]
    %v264 = vlaneseq
    %v265 = vshrl.u32 %v264, 7
    %v266 = vsub.s32 0, %v265
    %v267 = vrot.slane %v262, %v266
    %vm269 = vcmask 261120
    %v271 = vsel %vm269, %v255, 0
    %v274 = vsel %vm269, %v256, 0
    %v277 = vsel %vm269, %v257, 0
    %279 = vmatprep.subr.mxu0 0.0
    %280 = vmatpush1.msra.mxu0 %v258
    %281 = vmatprep.subr.mxu0 0.0
    %282 = vmatpush1.msra.mxu0 %v259
    %283 = vmatprep.subr.mxu0 0.0
    %284 = vmatpush1.msra.mxu0 %v260
    %285 = vmatprep.subr.mxu0 0.0
    %286 = vmatpush1.msra.mxu0 %v261
    %287 = vmatprep.subr.mxu0 0.0
    %288 = vmatpush1.msra.mxu0 0.0
    %289 = vmatprep.subr.mxu0 0.0
    %290 = vmatpush1.msra.mxu0 0.0
    %291 = vmatprep.subr.mxu0 0.0
    %292 = vmatpush1.msra.mxu0 0.0
    %293 = vmatprep.subr.mxu0 0.0
    %294 = vmatpush1.msra.mxu0 0.0
    %295 = vmatprep.subr.mxu0 0.0
    %296 = vmatpush1.msra.mxu0 0.0
    %297 = vmatprep.subr.mxu0 0.0
    %298 = vmatpush1.msra.mxu0 0.0
    %299 = vmatprep.subr.mxu0 0.0
    %300 = vmatpush1.msra.mxu0 0.0
    %301 = vmatprep.subr.mxu0 0.0
    %302 = vmatpush1.msra.mxu0 0.0
    %303 = vmatprep.subr.mxu0 0.0
    %304 = vmatpush1.msra.mxu0 0.0
    %305 = vmatprep.subr.mxu0 0.0
    %306 = vmatpush1.msra.mxu0 0.0
    %307 = vmatprep.subr.mxu0 0.0
    %308 = vmatpush1.msra.mxu0 0.0
    %309 = vmatprep.subr.mxu0 0.0
    %310 = vmatpush1.msra.mxu0 0.0
    %311 = vmatprep.subr.mxu0 0.0
    %312 = vmatpush1.msra.mxu0 0.0
    %313 = vmatprep.subr.mxu0 0.0
    %314 = vmatpush1.msra.mxu0 0.0
    %315 = vmatprep.subr.mxu0 0.0
    %316 = vmatpush1.msra.mxu0 0.0
    %317 = vmatprep.subr.mxu0 0.0
    %318 = vmatpush1.msra.mxu0 0.0
    %319 = vmatprep.subr.mxu0 0.0
    %320 = vmatpush1.msra.mxu0 0.0
    %321 = vmatprep.subr.mxu0 0.0
    %322 = vmatpush1.msra.mxu0 0.0
    %323 = vmatprep.subr.mxu0 0.0
    %324 = vmatpush1.msra.mxu0 0.0
    %325 = vmatprep.subr.mxu0 0.0
    %326 = vmatpush1.msra.mxu0 0.0
    %327 = vmatprep.subr.mxu0 0.0
    %328 = vmatpush1.msra.mxu0 0.0
    %329 = vmatprep.subr.mxu0 0.0
    %330 = vmatpush1.msra.mxu0 0.0
    %331 = vmatprep.subr.mxu0 0.0
    %332 = vmatpush1.msra.mxu0 0.0
    %333 = vmatprep.subr.mxu0 0.0
    %334 = vmatpush1.msra.mxu0 0.0
    %335 = vmatprep.subr.mxu0 0.0
    %336 = vmatpush1.msra.mxu0 0.0
    %337 = vmatprep.subr.mxu0 0.0
    %338 = vmatpush1.msra.mxu0 0.0
    %339 = vmatprep.subr.mxu0 0.0
    %340 = vmatpush1.msra.mxu0 0.0
    %341 = vmatprep.subr.mxu0 0.0
    %342 = vmatpush1.msra.mxu0 0.0
    %343 = vmatprep.mubr.f32.mxu0 0.0
    %344 = vmatmul.mubr.f32.gmra.mrb[0].mxu0 %v271
    %v345 = vpop.f32.mrb[0].mxu0
    %v346 = vadd.f32 %v267, %v345
    %v347 = vpop.f32.mrb[0].mxu0
    %348 = vmatprep.mubr.f32.mxu0 0.0
    %349 = vmatmul.mubr.f32.gmra.mrb[0].mxu0 %v274
    %v350 = vpop.f32.mrb[0].mxu0
    %v351 = vadd.f32 %v267, %v350
    %v352 = vpop.f32.mrb[0].mxu0
    %353 = vmatprep.mubr.f32.mxu0 0.0
    %354 = vmatmul.mubr.f32.gmra.mrb[0].mxu0 %v277
    %v355 = vpop.f32.mrb[0].mxu0
    %v356 = vadd.f32 %v267, %v355
    %v357 = vpop.f32.mrb[0].mxu0
    %358 = vdwg.mxu0
    %v359 = vmax.f32 %v346, 0.0
    %v360 = vmax.f32 %v351, 0.0
    %v361 = vmax.f32 %v356, 0.0
    %v362 = vld [vmem:[%s7] sm:$0xff]
    %v363 = vld [vmem:[%s7 + $0x8] sm:$0xff]
    %v364 = vld [vmem:[%s7 + $0x10] sm:$0xff]
    %v365 = vld [vmem:[%s7 + $0x18] sm:$0xff]
    %v366 = vld [vmem:[%s7 + $0x20] sm:$0xff]
    %v367 = vld [vmem:[%s7 + $0x28] sm:$0xff]
    %v368 = vld [vmem:[%s7 + $0x30] sm:$0xff]
    %v369 = vld [vmem:[%s7 + $0x38] sm:$0xff]
    %v370 = vld [vmem:[%s8] sm:$0x3]
    %v372 = vlaneseq
    %v373 = vshrl.u32 %v372, 7
    %v374 = vsub.s32 0, %v373
    %v375 = vrot.slane %v370, %v374
    %v376 = vlaneseq
    %v377 = vshrl.u32 %v376, 7
    %v378 = vsub.s32 1, %v377
    %v379 = vrot.slane %v370, %v378
    %v383 = vsel %vm269, %v359, 0
    %v386 = vsel %vm269, %v360, 0
    %v389 = vsel %vm269, %v361, 0
    %391 = vmatprep.subr.mxu0 %v363
    %392 = vmatpush1.msra.mxu0 %v362
    %393 = vmatprep.subr.mxu0 %v365
    %394 = vmatpush1.msra.mxu0 %v364
    %395 = vmatprep.subr.mxu0 %v367
    %396 = vmatpush1.msra.mxu0 %v366
    %397 = vmatprep.subr.mxu0 %v369
    %398 = vmatpush1.msra.mxu0 %v368
    %399 = vmatprep.subr.mxu0 0.0
    %400 = vmatpush1.msra.mxu0 0.0
    %401 = vmatprep.subr.mxu0 0.0
    %402 = vmatpush1.msra.mxu0 0.0
    %403 = vmatprep.subr.mxu0 0.0
    %404 = vmatpush1.msra.mxu0 0.0
    %405 = vmatprep.subr.mxu0 0.0
    %406 = vmatpush1.msra.mxu0 0.0
    %407 = vmatprep.subr.mxu0 0.0
    %408 = vmatpush1.msra.mxu0 0.0
    %409 = vmatprep.subr.mxu0 0.0
    %410 = vmatpush1.msra.mxu0 0.0
    %411 = vmatprep.subr.mxu0 0.0
    %412 = vmatpush1.msra.mxu0 0.0
    %413 = vmatprep.subr.mxu0 0.0
    %414 = vmatpush1.msra.mxu0 0.0
    %415 = vmatprep.subr.mxu0 0.0
    %416 = vmatpush1.msra.mxu0 0.0
    %417 = vmatprep.subr.mxu0 0.0
    %418 = vmatpush1.msra.mxu0 0.0
    %419 = vmatprep.subr.mxu0 0.0
    %420 = vmatpush1.msra.mxu0 0.0
    %421 = vmatprep.subr.mxu0 0.0
    %422 = vmatpush1.msra.mxu0 0.0
    %423 = vmatprep.subr.mxu0 0.0
    %424 = vmatpush1.msra.mxu0 0.0
    %425 = vmatprep.subr.mxu0 0.0
    %426 = vmatpush1.msra.mxu0 0.0
    %427 = vmatprep.subr.mxu0 0.0
    %428 = vmatpush1.msra.mxu0 0.0
    %429 = vmatprep.subr.mxu0 0.0
    %430 = vmatpush1.msra.mxu0 0.0
    %431 = vmatprep.subr.mxu0 0.0
    %432 = vmatpush1.msra.mxu0 0.0
    %433 = vmatprep.subr.mxu0 0.0
    %434 = vmatpush1.msra.mxu0 0.0
    %435 = vmatprep.subr.mxu0 0.0
    %436 = vmatpush1.msra.mxu0 0.0
    %437 = vmatprep.subr.mxu0 0.0
    %438 = vmatpush1.msra.mxu0 0.0
    %439 = vmatprep.subr.mxu0 0.0
    %440 = vmatpush1.msra.mxu0 0.0
    %441 = vmatprep.subr.mxu0 0.0
    %442 = vmatpush1.msra.mxu0 0.0
    %443 = vmatprep.subr.mxu0 0.0
    %444 = vmatpush1.msra.mxu0 0.0
    %445 = vmatprep.subr.mxu0 0.0
    %446 = vmatpush1.msra.mxu0 0.0
    %447 = vmatprep.subr.mxu0 0.0
    %448 = vmatpush1.msra.mxu0 0.0
    %449 = vmatprep.subr.mxu0 0.0
    %450 = vmatpush1.msra.mxu0 0.0
    %451 = vmatprep.subr.mxu0 0.0
    %452 = vmatpush1.msra.mxu0 0.0
    %453 = vmatprep.subr.mxu0 0.0
    %454 = vmatpush1.msra.mxu0 0.0
    %455 = vmatprep.mubr.f32.mxu0 0.0
    %456 = vmatmul.mubr.f32.gmra.mrb[0].mxu0 %v383
    %v457 = vpop.f32.mrb[0].mxu0
    %v458 = vadd.f32 %v375, %v457
    %v459 = vpop.f32.mrb[0].mxu0
    %v460 = vadd.f32 %v379, %v459
    %461 = vmatprep.mubr.f32.mxu0 0.0
    %462 = vmatmul.mubr.f32.gmra.mrb[0].mxu0 %v386
    %v463 = vpop.f32.mrb[0].mxu0
    %v464 = vadd.f32 %v375, %v463
    %v465 = vpop.f32.mrb[0].mxu0
    %v466 = vadd.f32 %v379, %v465
    %467 = vmatprep.mubr.f32.mxu0 0.0
    %468 = vmatmul.mubr.f32.gmra.mrb[0].mxu0 %v389
    %v469 = vpop.f32.mrb[0].mxu0
    %v470 = vadd.f32 %v375, %v469
    %v471 = vpop.f32.mrb[0].mxu0
    %v472 = vadd.f32 %v379, %v471
    %473 = vdwg.mxu0
    %v474 = vtanh.pop %v458
    %v475 = vtanh.pop %v464
    %v476 = vtanh.pop %v470
    %v477 = vmul.f32 %v474, 1.442695
    %v478 = vpow.pop %v477
    %v479 = vmul.f32 %v475, 1.442695
    %v480 = vpow.pop %v479
    %v481 = vmul.f32 %v476, 1.442695
    %v482 = vpow.pop %v481
    %v483 = vmul.f32 %v49, %v478
    %v484 = vmul.f32 %v50, %v480
    %v485 = vmul.f32 %v51, %v482
    %v486 = vadd.f32 %v483, %v460
    %v487 = vadd.f32 %v484, %v466
    %v488 = vadd.f32 %v485, %v472
    %489 = vst.msk [vmem:[%s9] sm:$0xff] %vm151, %v486
    %490 = vst.msk [vmem:[%s9 + $0x8] sm:$0xff] %vm151, %v487
    %vm491 = vcmask 44032
    %492 = vst.msk [vmem:[%s9 + $0x10] sm:$0xf] %vm491, %v488
    %v493 = vsel %vm151, %v474, 0.0
    %494 = vadd.xlane.f32.xlu0 %v493
    %v495 = vpop.xlane.xlu0 %494
    %v496 = vsel %vm151, %v475, 0.0
    %497 = vadd.xlane.f32.xlu0 %v496
    %v498 = vpop.xlane.xlu0 %497
    %v499 = vsel %vm491, %v476, 0.0
    %500 = vadd.xlane.f32.xlu0 %v499
    %v501 = vpop.xlane.xlu0 %500
    %v505 = vlaneseq
    %v506 = vand.u32 %v505, 127
    %v507 = vlaneseq
    %v508 = vshrl.u32 %v507, 7
    %v509 = vsub.s32 %v506, %v508
    %v510 = vrot.slane %v495, %v509
    %v511 = vadd.s32 %v506, 4294967288
    %v512 = vlaneseq
    %v513 = vshrl.u32 %v512, 7
    %v514 = vsub.s32 %v511, %v513
    %v515 = vrot.slane %v498, %v514
    %vm516 = vcmask 130112
    %v517 = vsel %vm516, %v515, %v510
    %v518 = vadd.s32 %v506, 4294967280
    %v519 = vlaneseq
    %v520 = vshrl.u32 %v519, 7
    %v521 = vsub.s32 %v518, %v520
    %v522 = vrot.slane %v501, %v521
    %vm523 = vcmask 195712
    %v524 = vsel %vm523, %v522, %v517
    %vm526 = vcmask 155648
    %527 = vst.msk [vmem:[#allocation5] sm:$0x1] %vm526, %v524
    // Predicated region
    $region42: #{tpu_custom_call.1} parent=1 // pred_check
      _
    $region43: #{tpu_custom_call.1} parent=1 // pred_check_branch
      %529 = sbr.rel (0) target = $region45
    $region44: #{tpu_custom_call.1} parent=1 // pred_region
      _
    $region45: #{tpu_custom_call.1} parent=1 // pred_fallthru
      _
    // Predicated region
    $region46: #{tpu_custom_call.1} parent=1 // pred_check
      _
    $region47: #{tpu_custom_call.1} parent=1 // pred_check_branch
      %531 = sbr.rel (0) target = $region49
    $region48: #{tpu_custom_call.1} parent=1 // pred_region
      %s533 = ssub.s32 16, 16
      %534 = vsyncadd [#allocation4], %s533
      %s536 = sshll.u32 [#allocation5], 4
      %s537 = int_to_ptr.vmem [resolvable:$true] %s536
      %539 = dma.vmem_to_hbm [thread:$0]  %s537, 16, %s10, [#allocation4]
    $region49: #{tpu_custom_call.1} parent=1 // pred_fallthru
      _
    // Predicated region
    $region50: #{tpu_custom_call.1} parent=1 // pred_check
      _
    $region51: #{tpu_custom_call.1} parent=1 // pred_check_branch
      %541 = sbr.rel (0) target = $region53
    $region52: #{tpu_custom_call.1} parent=1 // pred_region
      _
    $region53: #{tpu_custom_call.1} parent=1 // pred_fallthru
      _
    // Predicated region
    $region54: #{tpu_custom_call.1} parent=1 // pred_check
      _
    $region55: #{tpu_custom_call.1} parent=1 // pred_check_branch
      %543 = sbr.rel (0) target = $region57
    $region56: #{tpu_custom_call.1} parent=1 // pred_region
      %544 = dma.done [#allocation4], 16
    $region57: #{tpu_custom_call.1} parent=1 // pred_fallthru
      _
    %545 = vsyncpa [#allocation3], 1
    %546 = vsyncpa [#allocation4], 1

</llo_original>
